<compile_context>
chip_gen: v5e
topology: v5e:2x2
jax: 0.10.0
libtpu: 0.0.40
codegen_flags: <defaults>
</compile_context>

<pallas_src>
import math

import jax
import jax.numpy as jnp
from jax.experimental import pallas as pl
from jax.experimental.pallas import tpu as pltpu


def make_pe_table(d_model: int, max_len: int = 5000, dtype=jnp.float32) -> jnp.ndarray:
    """Sinusoidal PE table, shape [max_len, d_model], built in f32 then cast."""
    position = jnp.arange(0, max_len, dtype=jnp.float32)[:, None]            # [L, 1]
    div_term = jnp.exp(
        jnp.arange(0, d_model, 2, dtype=jnp.float32) * (-math.log(10000.0) / d_model)
    )                                                                         # [ceil(D/2)]
    angles = position * div_term                                              # [L, ceil(D/2)]
    pe = jnp.zeros((max_len, d_model), dtype=jnp.float32)
    pe = pe.at[:, 0::2].set(jnp.sin(angles))
    pe = pe.at[:, 1::2].set(jnp.cos(angles[:, : d_model // 2]))               # odd-D safe
    return pe.astype(dtype)


def _pe_add_kernel(x_ref, pe_ref, o_ref):
    # x_ref / o_ref: (tS, tB, D) tile in VMEM; pe_ref: (tS, D) tile in VMEM.
    # PE is already in the activation dtype -> pure VPU broadcast add.
    o_ref[...] = x_ref[...] + pe_ref[...][:, None, :]


def _choose_tiles(S: int, B: int, D: int, itemsize: int, max_tile_bytes: int):
    """Pick (tS, tB): sublane-aligned tiles that divide evenly and fit budget."""
    # Batch tile: multiple of 8 (sublane dim of the x/out block) or full B.
    if B % 8 == 0:
        tB = 8
        while tB * 2 <= min(B, 64) and B % (tB * 2) == 0:
            tB *= 2
    else:
        tB = B
    # Seq tile: largest multiple of 8 that divides S and keeps the x tile
    # within the byte budget (pe block's sublane dim is tS, hence the x8).
    row_bytes = tB * D * itemsize
    target = max(1, max_tile_bytes // row_bytes)
    tS = S
    if S > target:
        best = None
        d = 8
        while d <= min(S, target):
            if S % d == 0:
                best = d
            d += 8
        tS = best if best is not None else S
    return tS, tB


def positional_encoding(
    x: jnp.ndarray,
    pe_table: jnp.ndarray,
    *,
    max_tile_bytes: int = 4 * 1024 * 1024,
) -> jnp.ndarray:
    """x: [S, B, D]; returns x + pe_table[:S] broadcast over batch."""
    S, B, D = x.shape
    pe_slice = pe_table[:S, :].astype(x.dtype)          # pre-cast once, [S, D]

    itemsize = jnp.dtype(x.dtype).itemsize
    tS, tB = _choose_tiles(S, B, D, itemsize, max_tile_bytes)
    grid = (S // tS, B // tB)

    return pl.pallas_call(
        _pe_add_kernel,
        out_shape=jax.ShapeDtypeStruct((S, B, D), x.dtype),
        grid_spec=pltpu.PrefetchScalarGridSpec(
            num_scalar_prefetch=0,
            grid=grid,
            in_specs=[
                # x: tiled over (seq, batch), full D kept in the lane axis.
                pl.BlockSpec((tS, tB, D), lambda s, b: (s, b, 0)),
                # pe: ignores the batch grid index -> tile stays resident
                # (not re-DMA'd) across the inner batch axis.
                pl.BlockSpec((tS, D), lambda s, b: (s, 0)),
            ],
            out_specs=pl.BlockSpec((tS, tB, D), lambda s, b: (s, b, 0)),
        ),
        # Pure elementwise add: reuse x's HBM buffer for the output.
        input_output_aliases={0: 0},
        compiler_params=pltpu.CompilerParams(
            dimension_semantics=("parallel", "parallel"),
        ),
    )(x, pe_slice)


def positional_encoding_ref(x: jnp.ndarray, pe_table: jnp.ndarray) -> jnp.ndarray:
    S = x.shape[0]
    return x + pe_table[:S, None, :].astype(x.dtype)


if __name__ == "__main__":
    key = jax.random.PRNGKey(0)
    # Small but lane-dense smoke-test shape: seq=16, batch=4, d_model=128.
    S, B, D = 16, 4, 128
    x = jax.random.normal(key, (S, B, D), dtype=jnp.float32)

    pe_table = make_pe_table(d_model=D, max_len=64, dtype=x.dtype)

    out = positional_encoding(x, pe_table)
    out = jax.block_until_ready(out)

    ref = positional_encoding_ref(x, pe_table)
    assert out.shape == (S, B, D)
    assert jnp.allclose(out, ref, atol=1e-6, rtol=1e-6), "mismatch vs reference"

    # Also exercise the multi-tile grid path with a tiny VMEM budget.
    S2, B2, D2 = 64, 8, 128
    x2 = jax.random.normal(jax.random.PRNGKey(1), (S2, B2, D2), dtype=jnp.float32)
    pe2 = make_pe_table(d_model=D2, max_len=128, dtype=x2.dtype)
    out2 = jax.block_until_ready(
        positional_encoding(x2, pe2, max_tile_bytes=64 * 1024)
    )
    assert jnp.allclose(out2, positional_encoding_ref(x2, pe2), atol=1e-6, rtol=1e-6)

    print("KERNEL_OK")
</pallas_src>

<mosaic_0001>
module attributes {stable_mosaic.version = 11 : i64} {
  func.func @_pe_add_kernel(%arg0: i32, %arg1: i32, %arg2: memref<16x4x128xf32, #tpu.memory_space<vmem>>, %arg3: memref<16x128xf32, #tpu.memory_space<vmem>>, %arg4: memref<16x4x128xf32, #tpu.memory_space<vmem>>) attributes {dimension_semantics = [#tpu.dimension_semantics<parallel>, #tpu.dimension_semantics<parallel>], iteration_bounds = array<i64: 1, 1>, scalar_prefetch = 0 : i64, scratch_operands = 0 : i64, tpu.core_type = #tpu.core_type<tc>, window_params = [{transform_indices = @transform_0, window_bounds = array<i64: 16, 4, 128>}, {transform_indices = @transform_1, window_bounds = array<i64: 16, 128>}, {transform_indices = @transform_2, window_bounds = array<i64: 16, 4, 128>}]} {
    %c0 = arith.constant 0 : index
    %c0_0 = arith.constant 0 : index
    %c0_1 = arith.constant 0 : index
    %0 = vector.load %arg2[%c0, %c0_0, %c0_1] : memref<16x4x128xf32, #tpu.memory_space<vmem>>, vector<16x4x128xf32>
    %c0_2 = arith.constant 0 : index
    %c0_3 = arith.constant 0 : index
    %1 = vector.load %arg3[%c0_2, %c0_3] : memref<16x128xf32, #tpu.memory_space<vmem>>, vector<16x128xf32>
    %2 = vector.shape_cast %1 : vector<16x128xf32> to vector<16x1x128xf32>
    %3 = vector.broadcast %2 : vector<16x1x128xf32> to vector<16x4x128xf32>
    %4 = arith.addf %0, %3 : vector<16x4x128xf32>
    %c0_4 = arith.constant 0 : index
    %c0_5 = arith.constant 0 : index
    %c0_6 = arith.constant 0 : index
    %5 = vector.load %arg4[%c0_4, %c0_5, %c0_6] : memref<16x4x128xf32, #tpu.memory_space<vmem>>, vector<16x4x128xf32>
    tpu.vector_store %arg4[%c0_4, %c0_5, %c0_6], %4 {strides = array<i32>} : memref<16x4x128xf32, #tpu.memory_space<vmem>>, vector<16x4x128xf32>,
    return
  }
  func.func @transform_0(%arg0: i32, %arg1: i32) -> (i32, i32, i32) {
    %c0_i32 = arith.constant 0 : i32
    %c0_i32_0 = arith.constant 0 : i32
    return %arg0, %arg1, %c0_i32 : i32, i32, i32
  }
  func.func @transform_1(%arg0: i32, %arg1: i32) -> (i32, i32) {
    %c0_i32 = arith.constant 0 : i32
    %c0_i32_0 = arith.constant 0 : i32
    return %arg0, %c0_i32 : i32, i32
  }
  func.func @transform_2(%arg0: i32, %arg1: i32) -> (i32, i32, i32) {
    %c0_i32 = arith.constant 0 : i32
    %c0_i32_0 = arith.constant 0 : i32
    return %arg0, %arg1, %c0_i32 : i32, i32, i32
  }
}

</mosaic_0001>

<llo_original>
// kernel: tpu_custom_call.1
$region0: #{tpu_custom_call.1}
  #allocation0 [shape = 'u32[]', space=smem, size = 0x4, offset = 0x4, fixed_abs, tag = 'smem constant byte address 0x4 - core index']
  #allocation1 [shape = 'u32[72,128]{1,0:T(1,128)}', space=vmem, size = 0x9000, scoped, tag = 'internal scratch']
  %s0 = inlined_call_operand.hbm [shape: f32[16,4,128], index: 0, kind: input, shape index: {}, may-alias: {0,2}]
  %s1 = inlined_call_operand.vmem [shape: f32[16,128], index: 1, kind: input, shape index: {}]
  %s2 = inlined_call_operand.hbm [shape: f32[16,4,128], index: 2, kind: output, shape index: {}, may-alias: {0,2}]
  %s3 = sld [smem:[#allocation0]]
  $region22: #{tpu_custom_call.1} parent=0
    _
  %s5 = ssub.s32 1, %s3
  %s6 = scalar_select 0, %s5, %s3
  $region1: #{tpu_custom_call.1} parent=0
    #allocation2 [shape = 'u8[32768]{0}', space=vmem, size = 0x8000, scoped, tag = 'input window, operand 0, single buffered']
    #allocation3 [shape = 's32[1]{0}', space=sflag, size = 0x4, scoped, tag = 'scoped memory for tpu_custom_call.1']
    #allocation4 [shape = 's32[1]{0}', space=sflag, size = 0x4, scoped, tag = 'scoped memory for tpu_custom_call.1']
    #allocation5 [shape = 'u8[32768]{0}', space=vmem, size = 0x8000, scoped, tag = 'output window, operand 0, single buffered']
    %7 = vsyncpa [#allocation3], 0
    %8 = vsyncpa [#allocation4], 0
    // Predicated region
    $region2: #{tpu_custom_call.1} parent=1 // pred_check
      _
    $region3: #{tpu_custom_call.1} parent=1 // pred_check_branch
      %10 = sbr.rel (0) target = $region5
    $region4: #{tpu_custom_call.1} parent=1 // pred_region
      %12 = vsyncadd [#allocation3], 0
      %s13 = sshll.u32 %s0, 4
      %s14 = int_to_ptr.hbm [resolvable:$true] %s13
      %s15 = sshll.u32 [#allocation2], 4
      %s16 = int_to_ptr.vmem [resolvable:$true] %s15
      %21 = dma.hbm_to_vmem [thread:$0]  %s14, 1024, %s16, [#allocation3], 64, 64, 4
    $region5: #{tpu_custom_call.1} parent=1 // pred_fallthru
      _
    // Predicated region
    $region6: #{tpu_custom_call.1} parent=1 // pred_check
      _
    $region7: #{tpu_custom_call.1} parent=1 // pred_check_branch
      %23 = sbr.rel (0) target = $region9
    $region8: #{tpu_custom_call.1} parent=1 // pred_region
      _
    $region9: #{tpu_custom_call.1} parent=1 // pred_fallthru
      _
    // Predicated region
    $region10: #{tpu_custom_call.1} parent=1 // pred_check
      _
    $region11: #{tpu_custom_call.1} parent=1 // pred_check_branch
      %25 = sbr.rel (0) target = $region13
    $region12: #{tpu_custom_call.1} parent=1 // pred_region
      %27 = dma.done [#allocation3], 1024
    $region13: #{tpu_custom_call.1} parent=1 // pred_fallthru
      _
    %v28 = vld [vmem:[#allocation2] sm:$0xf]
    %v29 = vld [vmem:[#allocation2 + $0x4] sm:$0xf]
    %v30 = vld [vmem:[#allocation2 + $0x8] sm:$0xf]
    %v31 = vld [vmem:[#allocation2 + $0xc] sm:$0xf]
    %v32 = vld [vmem:[#allocation2 + $0x10] sm:$0xf]
    %v33 = vld [vmem:[#allocation2 + $0x14] sm:$0xf]
    %v34 = vld [vmem:[#allocation2 + $0x18] sm:$0xf]
    %v35 = vld [vmem:[#allocation2 + $0x1c] sm:$0xf]
    %v36 = vld [vmem:[#allocation2 + $0x20] sm:$0xf]
    %v37 = vld [vmem:[#allocation2 + $0x24] sm:$0xf]
    %v38 = vld [vmem:[#allocation2 + $0x28] sm:$0xf]
    %v39 = vld [vmem:[#allocation2 + $0x2c] sm:$0xf]
    %v40 = vld [vmem:[#allocation2 + $0x30] sm:$0xf]
    %v41 = vld [vmem:[#allocation2 + $0x34] sm:$0xf]
    %v42 = vld [vmem:[#allocation2 + $0x38] sm:$0xf]
    %v43 = vld [vmem:[#allocation2 + $0x3c] sm:$0xf]
    %v44 = vld [vmem:[%s1] sm:$0xff]
    %v45 = vld [vmem:[%s1 + $0x8] sm:$0xff]
    %v48 = vrot.slane %v44, 1
    %v49 = vrot.slane %v44, 2
    %v50 = vrot.slane %v44, 3
    %v51 = vrot.slane %v44, 4
    %v52 = vrot.slane %v44, 5
    %v53 = vrot.slane %v44, 6
    %v54 = vrot.slane %v44, 7
    %v55 = vrot.slane %v45, 1
    %v56 = vrot.slane %v45, 2
    %v57 = vrot.slane %v45, 3
    %v58 = vrot.slane %v45, 4
    %v59 = vrot.slane %v45, 5
    %v60 = vrot.slane %v45, 6
    %v61 = vrot.slane %v45, 7
    %v62 = vperm.slane %v44, 0
    %v63 = vperm.slane %v48, 0
    %v64 = vperm.slane %v49, 0
    %v65 = vperm.slane %v50, 0
    %v66 = vperm.slane %v51, 0
    %v67 = vperm.slane %v52, 0
    %v68 = vperm.slane %v53, 0
    %v69 = vperm.slane %v54, 0
    %v70 = vperm.slane %v45, 0
    %v71 = vperm.slane %v55, 0
    %v72 = vperm.slane %v56, 0
    %v73 = vperm.slane %v57, 0
    %v74 = vperm.slane %v58, 0
    %v75 = vperm.slane %v59, 0
    %v76 = vperm.slane %v60, 0
    %v77 = vperm.slane %v61, 0
    %v94 = vadd.f32 %v28, %v62
    %v95 = vadd.f32 %v29, %v63
    %v96 = vadd.f32 %v30, %v64
    %v97 = vadd.f32 %v31, %v65
    %v98 = vadd.f32 %v32, %v66
    %v99 = vadd.f32 %v33, %v67
    %v100 = vadd.f32 %v34, %v68
    %v101 = vadd.f32 %v35, %v69
    %v102 = vadd.f32 %v36, %v70
    %v103 = vadd.f32 %v37, %v71
    %v104 = vadd.f32 %v38, %v72
    %v105 = vadd.f32 %v39, %v73
    %v106 = vadd.f32 %v40, %v74
    %v107 = vadd.f32 %v41, %v75
    %v108 = vadd.f32 %v42, %v76
    %v109 = vadd.f32 %v43, %v77
    %110 = vst [vmem:[#allocation5] sm:$0xf] %v94
    %111 = vst [vmem:[#allocation5 + $0x4] sm:$0xf] %v95
    %112 = vst [vmem:[#allocation5 + $0x8] sm:$0xf] %v96
    %113 = vst [vmem:[#allocation5 + $0xc] sm:$0xf] %v97
    %114 = vst [vmem:[#allocation5 + $0x10] sm:$0xf] %v98
    %115 = vst [vmem:[#allocation5 + $0x14] sm:$0xf] %v99
    %116 = vst [vmem:[#allocation5 + $0x18] sm:$0xf] %v100
    %117 = vst [vmem:[#allocation5 + $0x1c] sm:$0xf] %v101
    %118 = vst [vmem:[#allocation5 + $0x20] sm:$0xf] %v102
    %119 = vst [vmem:[#allocation5 + $0x24] sm:$0xf] %v103
    %120 = vst [vmem:[#allocation5 + $0x28] sm:$0xf] %v104
    %121 = vst [vmem:[#allocation5 + $0x2c] sm:$0xf] %v105
    %122 = vst [vmem:[#allocation5 + $0x30] sm:$0xf] %v106
    %123 = vst [vmem:[#allocation5 + $0x34] sm:$0xf] %v107
    %124 = vst [vmem:[#allocation5 + $0x38] sm:$0xf] %v108
    %125 = vst [vmem:[#allocation5 + $0x3c] sm:$0xf] %v109
    // Predicated region
    $region14: #{tpu_custom_call.1} parent=1 // pred_check
      _
    $region15: #{tpu_custom_call.1} parent=1 // pred_check_branch
      %127 = sbr.rel (0) target = $region17
    $region16: #{tpu_custom_call.1} parent=1 // pred_region
      %129 = vsyncadd [#allocation4], 0
      %s130 = sshll.u32 [#allocation5], 4
      %s131 = int_to_ptr.vmem [resolvable:$true] %s130
      %s132 = sshll.u32 %s2, 4
      %s133 = int_to_ptr.hbm [resolvable:$true] %s132
      %138 = dma.vmem_to_hbm [thread:$0]  %s131, 1024, %s133, [#allocation4], 64, 64, 4
    $region17: #{tpu_custom_call.1} parent=1 // pred_fallthru
      _
    // Predicated region
    $region18: #{tpu_custom_call.1} parent=1 // pred_check
      _
    $region19: #{tpu_custom_call.1} parent=1 // pred_check_branch
      %140 = sbr.rel (0) target = $region21
    $region20: #{tpu_custom_call.1} parent=1 // pred_region
      %142 = dma.done [#allocation4], 1024
    $region21: #{tpu_custom_call.1} parent=1 // pred_fallthru
      _
    %143 = vsyncpa [#allocation3], 1
    %144 = vsyncpa [#allocation4], 1

</llo_original>
